<compile_context>
chip_gen: v5e
topology: v5e:2x2
jax: 0.10.0
libtpu: 0.0.40
codegen_flags: <defaults>
</compile_context>

<pallas_src>
import functools
import math

import jax
import jax.numpy as jnp
from jax.experimental import pallas as pl
from jax.experimental.pallas import tpu as pltpu

_SQRT_2PI = math.sqrt(2.0 * math.pi)
_LOG3 = math.log(3.0)


# --------------------------------------------------------------------------
# Fused kernel: prior construction + all GCN layers in one call
# --------------------------------------------------------------------------
def _fused_gcn_kernel(n_layers, dist_ref, sigma_w_ref, x_ref, *rest):
    """rest = (w_t_ref_0, ..., w_t_ref_{L-1}, x_out_ref, prior_ref)."""
    w_refs = rest[:n_layers]
    x_out_ref = rest[n_layers]
    prior_ref = rest[n_layers + 1]

    d = dist_ref.shape[0]
    dist = dist_ref[...]                                    # (d, d)
    sw = sigma_w_ref[...]                                   # (d, 1)

    # sigma = 3 ** (sigmoid(5 * w) + 1e-5) - 1, one value per row.
    sigma = jax.nn.sigmoid(sw * 5.0) + 1e-5
    sigma = jnp.exp(sigma * _LOG3) - 1.0                    # (d, 1)

    # Reciprocal-multiply instead of per-element divides.  Only d values each;
    # exact (approx=False) reciprocal so the 1e-5 prior tolerance holds.
    inv_two_sigma2 = pl.reciprocal(2.0 * sigma * sigma)     # (d, 1)
    inv_norm = pl.reciprocal(_SQRT_2PI * sigma)             # (d, 1)

    # Gaussian prior; mat2 and the mask are derived in-kernel from dist_mat
    # (a single [d, d] HBM input instead of three f32 [d, d] inputs).
    prior = jnp.exp(-(dist * dist) * inv_two_sigma2) * inv_norm
    rows = jax.lax.broadcasted_iota(jnp.int32, (d, d), 0)
    cols = jax.lax.broadcasted_iota(jnp.int32, (d, d), 1)
    mask = (dist == 0.0) & (rows != cols)                   # off-diagonal zeros
    prior = jnp.where(mask, 0.0, prior)

    col_sum = jnp.sum(prior, axis=0, keepdims=True)         # (1, d)
    prior = prior * pl.reciprocal(col_sum)                  # column-normalize
    prior_ref[...] = prior

    # GCN layers: relu((prior @ x) @ W_t).  n_layers is a static Python int;
    # weights are pre-transposed (no in-kernel .T), prior and x stay on chip.
    xv = x_ref[...]                                         # (d, Cin)
    for i in range(n_layers):
        wx = jnp.dot(prior, xv, preferred_element_type=jnp.float32)
        xv = jnp.maximum(
            jnp.dot(wx, w_refs[i][...], preferred_element_type=jnp.float32),
            0.0)
    x_out_ref[...] = xv                                     # (d, P) lane-dense


# --------------------------------------------------------------------------
# Wrapper
# --------------------------------------------------------------------------
def single_gcn_forward(x, dist_mat, sigma_w, weights, n_layers):
    """Matches SingleGCN.forward: returns (x_out, prior)."""
    d, cin = x.shape
    cout = weights[0].shape[0]

    # Lane-dense padded output width (multiple of 128): unmasked full-width
    # stores and a full-width MXU N.  Zero padding is exact (relu(0) = 0 and
    # padded weight rows/cols are zero); the pad is sliced off in the wrapper.
    p = pl.cdiv(cout, 128) * 128

    # Pre-transpose + pad weights once in the wrapper (free layout plumbing).
    w_t = [jnp.pad(weights[0].T.astype(jnp.float32),
                   ((0, 0), (0, p - cout)))]                        # (Cin, P)
    for i in range(1, n_layers):
        w_t.append(jnp.pad(weights[i].T.astype(jnp.float32),
                           ((0, p - cout), (0, p - cout))))         # (P, P)

    kernel = functools.partial(_fused_gcn_kernel, n_layers)

    in_specs = [
        pl.BlockSpec((d, d), lambda i: (0, 0)),       # dist_mat
        pl.BlockSpec((d, 1), lambda i: (0, 0)),       # sigma weight (d, 1)
        pl.BlockSpec((d, cin), lambda i: (0, 0)),     # x
    ] + [pl.BlockSpec(w.shape, lambda i: (0, 0)) for w in w_t]

    x_pad, prior = pl.pallas_call(
        kernel,
        out_shape=(jax.ShapeDtypeStruct((d, p), jnp.float32),
                   jax.ShapeDtypeStruct((d, d), jnp.float32)),
        grid=(1,),
        in_specs=in_specs,
        out_specs=(pl.BlockSpec((d, p), lambda i: (0, 0)),
                   pl.BlockSpec((d, d), lambda i: (0, 0))),
        compiler_params=pltpu.CompilerParams(
            dimension_semantics=("arbitrary",)),
    )(dist_mat, sigma_w, x, *w_t)

    # TODO(synk): for large d, tile over d with "parallel" grid axes (2 TCs on
    # v7x) and re-derive VMEM budgets per generation (64 MiB v7x / 128 MiB v6e).
    return x_pad[:, :cout], prior


# --------------------------------------------------------------------------
# Pure-JAX reference for correctness checking
# --------------------------------------------------------------------------
def reference_forward(x, dist_mat, sigma_w, weights, n_layers):
    d = dist_mat.shape[0]
    mat2 = dist_mat ** 2
    mask = (dist_mat == 0.0) & (~jnp.eye(d, dtype=bool))
    sigma = jax.nn.sigmoid(sigma_w * 5.0) + 1e-5
    sigma = jnp.power(3.0, sigma) - 1.0
    e = jnp.exp(-mat2 / (2.0 * sigma ** 2))
    prior = e / (math.sqrt(2.0 * math.pi) * sigma)
    prior = jnp.where(mask, 0.0, prior)
    prior = prior / prior.sum(0)
    for i in range(n_layers):
        wx = prior @ x
        x = jax.nn.relu(wx @ weights[i].T)
    return x, prior


# --------------------------------------------------------------------------
if __name__ == "__main__":
    d = 16            # number of graph nodes (dist_mat is d x d)
    in_channels = 8
    out_channels = 32
    n_layers = 2      # exercises both weight shapes: [Cout,Cin] and [Cout,Cout]

    key = jax.random.PRNGKey(0)
    k_dist, k_zero, k_x, k_sig, k_w0, k_w1 = jax.random.split(key, 6)

    # Symmetric distance matrix, zero diagonal, a few off-diagonal zeros
    # (so generate_mask() has something to mask).
    raw = jax.random.uniform(k_dist, (d, d), dtype=jnp.float32,
                             minval=0.0, maxval=3.0)
    dist_mat = (raw + raw.T) * 0.5
    dist_mat = dist_mat * (1.0 - jnp.eye(d, dtype=jnp.float32))      # zero diag
    zero_off = (jax.random.uniform(k_zero, (d, d)) < 0.1)
    zero_off = zero_off | zero_off.T
    dist_mat = jnp.where(zero_off, 0.0, dist_mat)

    # Node features
    x = jax.random.normal(k_x, (d, in_channels), dtype=jnp.float32)

    # Parameters: self.sigma = Linear(1, d) -> weight (d, 1)
    sigma_w = jax.random.normal(k_sig, (d, 1), dtype=jnp.float32) * 0.1
    # linears[0]: Linear(Cin, Cout, bias=False) -> weight (Cout, Cin)
    bound0 = 1.0 / math.sqrt(in_channels)
    w0 = jax.random.uniform(k_w0, (out_channels, in_channels),
                            dtype=jnp.float32, minval=-bound0, maxval=bound0)
    # linears[1]: Linear(Cout, Cout, bias=False) -> weight (Cout, Cout)
    bound1 = 1.0 / math.sqrt(out_channels)
    w1 = jax.random.uniform(k_w1, (out_channels, out_channels),
                            dtype=jnp.float32, minval=-bound1, maxval=bound1)
    weights = [w0, w1]

    out_x, out_prior = single_gcn_forward(x, dist_mat, sigma_w, weights, n_layers)
    out_x = jax.block_until_ready(out_x)
    out_prior = jax.block_until_ready(out_prior)

    ref_x, ref_prior = reference_forward(x, dist_mat, sigma_w, weights, n_layers)
    assert out_x.shape == ref_x.shape and out_prior.shape == ref_prior.shape
    assert jnp.allclose(out_prior, ref_prior, atol=1e-5, rtol=1e-5), "prior mismatch"
    assert jnp.allclose(out_x, ref_x, atol=2e-4, rtol=2e-4), "output mismatch"

    print("KERNEL_OK")
</pallas_src>

<mosaic_0001>
module attributes {stable_mosaic.version = 11 : i64} {
  func.func @_fused_gcn_kernel(%arg0: i32, %arg1: memref<16x16xf32, #tpu.memory_space<vmem>>, %arg2: memref<16x1xf32, #tpu.memory_space<vmem>>, %arg3: memref<16x8xf32, #tpu.memory_space<vmem>>, %arg4: memref<8x128xf32, #tpu.memory_space<vmem>>, %arg5: memref<128x128xf32, #tpu.memory_space<vmem>>, %arg6: memref<16x128xf32, #tpu.memory_space<vmem>>, %arg7: memref<16x16xf32, #tpu.memory_space<vmem>>) attributes {dimension_semantics = [#tpu.dimension_semantics<arbitrary>], iteration_bounds = array<i64: 1>, scalar_prefetch = 0 : i64, scratch_operands = 0 : i64, tpu.core_type = #tpu.core_type<tc>, window_params = [{pipeline_mode = #tpu.pipeline_mode<synchronous>, transform_indices = @transform_0, window_bounds = array<i64: 16, 16>}, {pipeline_mode = #tpu.pipeline_mode<synchronous>, transform_indices = @transform_1, window_bounds = array<i64: 16, 1>}, {pipeline_mode = #tpu.pipeline_mode<synchronous>, transform_indices = @transform_2, window_bounds = array<i64: 16, 8>}, {pipeline_mode = #tpu.pipeline_mode<synchronous>, transform_indices = @transform_3, window_bounds = array<i64: 8, 128>}, {pipeline_mode = #tpu.pipeline_mode<synchronous>, transform_indices = @transform_4, window_bounds = array<i64: 128, 128>}, {pipeline_mode = #tpu.pipeline_mode<synchronous>, transform_indices = @transform_5, window_bounds = array<i64: 16, 128>}, {pipeline_mode = #tpu.pipeline_mode<synchronous>, transform_indices = @transform_6, window_bounds = array<i64: 16, 16>}]} {
    %c0 = arith.constant 0 : index
    %c0_0 = arith.constant 0 : index
    %0 = vector.load %arg1[%c0, %c0_0] : memref<16x16xf32, #tpu.memory_space<vmem>>, vector<16x16xf32>
    %c0_1 = arith.constant 0 : index
    %c0_2 = arith.constant 0 : index
    %1 = vector.load %arg2[%c0_1, %c0_2] : memref<16x1xf32, #tpu.memory_space<vmem>>, vector<16x1xf32>
    %cst = arith.constant 5.000000e+00 : f32
    %2 = vector.broadcast %cst : f32 to vector<16x1xf32>
    %3 = arith.mulf %1, %2 : vector<16x1xf32>
    %4 = arith.negf %3 : vector<16x1xf32>
    %5 = math.exp %4 : vector<16x1xf32>
    %cst_3 = arith.constant 1.000000e+00 : f32
    %6 = vector.broadcast %cst_3 : f32 to vector<16x1xf32>
    %7 = arith.addf %6, %5 : vector<16x1xf32>
    %8 = arith.divf %6, %7 : vector<16x1xf32>
    %cst_4 = arith.constant 9.99999974E-6 : f32
    %9 = vector.broadcast %cst_4 : f32 to vector<16x1xf32>
    %10 = arith.addf %8, %9 : vector<16x1xf32>
    %cst_5 = arith.constant 1.09861231 : f32
    %11 = vector.broadcast %cst_5 : f32 to vector<16x1xf32>
    %12 = arith.mulf %10, %11 : vector<16x1xf32>
    %13 = math.exp %12 : vector<16x1xf32>
    %cst_6 = arith.constant 1.000000e+00 : f32
    %14 = vector.broadcast %cst_6 : f32 to vector<16x1xf32>
    %15 = arith.subf %13, %14 : vector<16x1xf32>
    %cst_7 = arith.constant 2.000000e+00 : f32
    %16 = vector.broadcast %cst_7 : f32 to vector<16x1xf32>
    %17 = arith.mulf %16, %15 : vector<16x1xf32>
    %18 = arith.mulf %17, %15 : vector<16x1xf32>
    %19 = tpu.reciprocal %18 : vector<16x1xf32> -> vector<16x1xf32>
    %cst_8 = arith.constant 2.50662827 : f32
    %20 = vector.broadcast %cst_8 : f32 to vector<16x1xf32>
    %21 = arith.mulf %20, %15 : vector<16x1xf32>
    %22 = tpu.reciprocal %21 : vector<16x1xf32> -> vector<16x1xf32>
    %23 = arith.mulf %0, %0 : vector<16x16xf32>
    %cst_9 = arith.constant 0.000000e+00 : f32
    %24 = vector.broadcast %cst_9 : f32 to vector<16x16xf32>
    %25 = arith.subf %24, %23 : vector<16x16xf32>
    %26 = vector.broadcast %19 : vector<16x1xf32> to vector<16x16xf32>
    %27 = arith.mulf %25, %26 : vector<16x16xf32>
    %28 = math.exp %27 : vector<16x16xf32>
    %29 = vector.broadcast %22 : vector<16x1xf32> to vector<16x16xf32>
    %30 = arith.mulf %28, %29 : vector<16x16xf32>
    %31 = tpu.iota {dimensions = array<i32: 0>} : vector<16x16xi32>
    %32 = tpu.iota {dimensions = array<i32: 1>} : vector<16x16xi32>
    %cst_10 = arith.constant 0.000000e+00 : f32
    %33 = vector.broadcast %cst_10 : f32 to vector<16x16xf32>
    %34 = arith.cmpf oeq, %0, %33 : vector<16x16xf32>
    %35 = arith.cmpi ne, %31, %32 : vector<16x16xi32>
    %36 = arith.andi %34, %35 : vector<16x16xi1>
    %cst_11 = arith.constant 0.000000e+00 : f32
    %37 = vector.broadcast %cst_11 : f32 to vector<16x16xf32>
    %38 = arith.select %36, %37, %30 : vector<16x16xi1>, vector<16x16xf32>
    %cst_12 = arith.constant dense<0.000000e+00> : vector<16xf32>
    %39 = vector.multi_reduction <add>, %38, %cst_12 [0] : vector<16x16xf32> to vector<16xf32>
    %40 = vector.shape_cast %39 : vector<16xf32> to vector<1x16xf32>
    %41 = tpu.reciprocal %40 : vector<1x16xf32> -> vector<1x16xf32>
    %42 = vector.broadcast %41 : vector<1x16xf32> to vector<16x16xf32>
    %43 = arith.mulf %38, %42 : vector<16x16xf32>
    %c0_13 = arith.constant 0 : index
    %c0_14 = arith.constant 0 : index
    %44 = vector.load %arg7[%c0_13, %c0_14] : memref<16x16xf32, #tpu.memory_space<vmem>>, vector<16x16xf32>
    tpu.vector_store %arg7[%c0_13, %c0_14], %43 {strides = array<i32>} : memref<16x16xf32, #tpu.memory_space<vmem>>, vector<16x16xf32>,
    %c0_15 = arith.constant 0 : index
    %c0_16 = arith.constant 0 : index
    %45 = vector.load %arg3[%c0_15, %c0_16] : memref<16x8xf32, #tpu.memory_space<vmem>>, vector<16x8xf32>
    %cst_17 = arith.constant dense<0.000000e+00> : vector<16x8xf32>
    %46 = tpu.matmul %43, %45, %cst_17 {dimension_numbers = #tpu.dot_dimension_numbers<[1], [0], [0], [1], [0, 0, 1, 1], [], []>} : vector<16x16xf32>, vector<16x8xf32>, vector<16x8xf32> -> vector<16x8xf32>
    %c0_18 = arith.constant 0 : index
    %c0_19 = arith.constant 0 : index
    %47 = vector.load %arg4[%c0_18, %c0_19] : memref<8x128xf32, #tpu.memory_space<vmem>>, vector<8x128xf32>
    %cst_20 = arith.constant dense<0.000000e+00> : vector<16x128xf32>
    %48 = tpu.matmul %46, %47, %cst_20 {dimension_numbers = #tpu.dot_dimension_numbers<[1], [0], [0], [1], [0, 0, 1, 1], [], []>} : vector<16x8xf32>, vector<8x128xf32>, vector<16x128xf32> -> vector<16x128xf32>
    %cst_21 = arith.constant 0.000000e+00 : f32
    %49 = vector.broadcast %cst_21 : f32 to vector<16x128xf32>
    %50 = arith.maximumf %48, %49 : vector<16x128xf32>
    %cst_22 = arith.constant dense<0.000000e+00> : vector<16x128xf32>
    %51 = tpu.matmul %43, %50, %cst_22 {dimension_numbers = #tpu.dot_dimension_numbers<[1], [0], [0], [1], [0, 0, 1, 1], [], []>} : vector<16x16xf32>, vector<16x128xf32>, vector<16x128xf32> -> vector<16x128xf32>
    %c0_23 = arith.constant 0 : index
    %c0_24 = arith.constant 0 : index
    %52 = vector.load %arg5[%c0_23, %c0_24] : memref<128x128xf32, #tpu.memory_space<vmem>>, vector<128x128xf32>
    %cst_25 = arith.constant dense<0.000000e+00> : vector<16x128xf32>
    %53 = tpu.matmul %51, %52, %cst_25 {dimension_numbers = #tpu.dot_dimension_numbers<[1], [0], [0], [1], [0, 0, 1, 1], [], []>} : vector<16x128xf32>, vector<128x128xf32>, vector<16x128xf32> -> vector<16x128xf32>
    %cst_26 = arith.constant 0.000000e+00 : f32
    %54 = vector.broadcast %cst_26 : f32 to vector<16x128xf32>
    %55 = arith.maximumf %53, %54 : vector<16x128xf32>
    %c0_27 = arith.constant 0 : index
    %c0_28 = arith.constant 0 : index
    %56 = vector.load %arg6[%c0_27, %c0_28] : memref<16x128xf32, #tpu.memory_space<vmem>>, vector<16x128xf32>
    tpu.vector_store %arg6[%c0_27, %c0_28], %55 {strides = array<i32>} : memref<16x128xf32, #tpu.memory_space<vmem>>, vector<16x128xf32>,
    return
  }
  func.func @transform_0(%arg0: i32) -> (i32, i32) {
    %c0_i32 = arith.constant 0 : i32
    %c0_i32_0 = arith.constant 0 : i32
    %c0_i32_1 = arith.constant 0 : i32
    return %c0_i32, %c0_i32_0 : i32, i32
  }
  func.func @transform_1(%arg0: i32) -> (i32, i32) {
    %c0_i32 = arith.constant 0 : i32
    %c0_i32_0 = arith.constant 0 : i32
    %c0_i32_1 = arith.constant 0 : i32
    return %c0_i32, %c0_i32_0 : i32, i32
  }
  func.func @transform_2(%arg0: i32) -> (i32, i32) {
    %c0_i32 = arith.constant 0 : i32
    %c0_i32_0 = arith.constant 0 : i32
    %c0_i32_1 = arith.constant 0 : i32
    return %c0_i32, %c0_i32_0 : i32, i32
  }
  func.func @transform_3(%arg0: i32) -> (i32, i32) {
    %c0_i32 = arith.constant 0 : i32
    %c0_i32_0 = arith.constant 0 : i32
    %c0_i32_1 = arith.constant 0 : i32
    return %c0_i32, %c0_i32_0 : i32, i32
  }
  func.func @transform_4(%arg0: i32) -> (i32, i32) {
    %c0_i32 = arith.constant 0 : i32
    %c0_i32_0 = arith.constant 0 : i32
    %c0_i32_1 = arith.constant 0 : i32
    return %c0_i32, %c0_i32_0 : i32, i32
  }
  func.func @transform_5(%arg0: i32) -> (i32, i32) {
    %c0_i32 = arith.constant 0 : i32
    %c0_i32_0 = arith.constant 0 : i32
    %c0_i32_1 = arith.constant 0 : i32
    return %c0_i32, %c0_i32_0 : i32, i32
  }
  func.func @transform_6(%arg0: i32) -> (i32, i32) {
    %c0_i32 = arith.constant 0 : i32
    %c0_i32_0 = arith.constant 0 : i32
    %c0_i32_1 = arith.constant 0 : i32
    return %c0_i32, %c0_i32_0 : i32, i32
  }
}

</mosaic_0001>

<llo_original>
// kernel: tpu_custom_call.1
$region0: #{tpu_custom_call.1}
  #allocation0 [shape = 'u32[]', space=smem, size = 0x4, offset = 0x4, fixed_abs, tag = 'smem constant byte address 0x4 - core index']
  #allocation1 [shape = 'u32[72,128]{1,0:T(1,128)}', space=vmem, size = 0x9000, scoped, tag = 'internal scratch']
  %s0 = inlined_call_operand.vmem [shape: f32[16,16], index: 0, kind: input, shape index: {}]
  %s1 = inlined_call_operand.vmem [shape: f32[16,1], index: 1, kind: input, shape index: {}]
  %s2 = inlined_call_operand.vmem [shape: f32[16,8], index: 2, kind: input, shape index: {}]
  %s3 = inlined_call_operand.vmem [shape: f32[8,128], index: 3, kind: input, shape index: {}]
  %s4 = inlined_call_operand.hbm [shape: f32[128,128], index: 4, kind: input, shape index: {}]
  %s5 = inlined_call_operand.hbm [shape: f32[16,128], index: 5, kind: output, shape index: {0}]
  %s6 = inlined_call_operand.hbm [shape: f32[16,16], index: 6, kind: output, shape index: {1}]
  %7 = xla_tuple %s5, %s6
  %s8 = sld [smem:[#allocation0]]
  $region42: #{tpu_custom_call.1} parent=0
    _
  %s10 = ssub.s32 1, %s8
  %s11 = scalar_select 0, %s10, %s8
  $region1: #{tpu_custom_call.1} parent=0
    #allocation2 [shape = 'u8[65536]{0}', space=vmem, size = 0x10000, scoped, tag = 'input window, operand 4, single buffered']
    #allocation3 [shape = 's32[1]{0}', space=sflag, size = 0x4, scoped, tag = 'scoped memory for tpu_custom_call.1']
    #allocation4 [shape = 's32[1]{0}', space=sflag, size = 0x4, scoped, tag = 'scoped memory for tpu_custom_call.1']
    #allocation5 [shape = 'u8[8192]{0}', space=vmem, size = 0x2000, scoped, tag = 'output window, operand 0, single buffered']
    #allocation6 [shape = 'u8[8192]{0}', space=vmem, size = 0x2000, scoped, tag = 'output window, operand 1, single buffered']
    #allocation7 [shape = 's32[1]{0}', space=sflag, size = 0x4, scoped, tag = 'scoped memory for tpu_custom_call.1']
    %12 = vsyncpa [#allocation3], 0
    %13 = vsyncpa [#allocation4], 0
    %14 = vsyncpa [#allocation7], 0
    // Predicated region
    $region2: #{tpu_custom_call.1} parent=1 // pred_check
      _
    $region3: #{tpu_custom_call.1} parent=1 // pred_check_branch
      %16 = sbr.rel (0) target = $region5
    $region4: #{tpu_custom_call.1} parent=1 // pred_region
      _
    $region5: #{tpu_custom_call.1} parent=1 // pred_fallthru
      _
    // Predicated region
    $region6: #{tpu_custom_call.1} parent=1 // pred_check
      _
    $region7: #{tpu_custom_call.1} parent=1 // pred_check_branch
      %18 = sbr.rel (0) target = $region9
    $region8: #{tpu_custom_call.1} parent=1 // pred_region
      _
    $region9: #{tpu_custom_call.1} parent=1 // pred_fallthru
      _
    // Predicated region
    $region10: #{tpu_custom_call.1} parent=1 // pred_check
      _
    $region11: #{tpu_custom_call.1} parent=1 // pred_check_branch
      %20 = sbr.rel (0) target = $region13
    $region12: #{tpu_custom_call.1} parent=1 // pred_region
      _
    $region13: #{tpu_custom_call.1} parent=1 // pred_fallthru
      _
    // Predicated region
    $region14: #{tpu_custom_call.1} parent=1 // pred_check
      _
    $region15: #{tpu_custom_call.1} parent=1 // pred_check_branch
      %22 = sbr.rel (0) target = $region17
    $region16: #{tpu_custom_call.1} parent=1 // pred_region
      _
    $region17: #{tpu_custom_call.1} parent=1 // pred_fallthru
      _
    // Predicated region
    $region18: #{tpu_custom_call.1} parent=1 // pred_check
      _
    $region19: #{tpu_custom_call.1} parent=1 // pred_check_branch
      %24 = sbr.rel (0) target = $region21
    $region20: #{tpu_custom_call.1} parent=1 // pred_region
      %26 = vsyncadd [#allocation3], 0
      %s27 = sshll.u32 %s4, 4
      %s28 = int_to_ptr.hbm [resolvable:$true] %s27
      %s29 = sshll.u32 [#allocation2], 4
      %s30 = int_to_ptr.vmem [resolvable:$true] %s29
      %35 = dma.hbm_to_vmem [thread:$0]  %s28, 2048, %s30, [#allocation3], 128, 128, 8
    $region21: #{tpu_custom_call.1} parent=1 // pred_fallthru
      _
    // Predicated region
    $region22: #{tpu_custom_call.1} parent=1 // pred_check
      _
    $region23: #{tpu_custom_call.1} parent=1 // pred_check_branch
      %37 = sbr.rel (0) target = $region25
    $region24: #{tpu_custom_call.1} parent=1 // pred_region
      %39 = dma.done [#allocation3], 2048
    $region25: #{tpu_custom_call.1} parent=1 // pred_fallthru
      _
    %v40 = vld [vmem:[%s0] sm:$0xff]
    %v41 = vld [vmem:[%s0 + $0x8] sm:$0xff]
    %v42 = vld [vmem:[%s1] sm:$0xff]
    %v43 = vld [vmem:[%s1 + $0x8] sm:$0xff]
    %v44 = vmul.f32 %v42, 5.0
    %v45 = vmul.f32 %v43, 5.0
    %v46 = vxor.u32 %v44, 2147483648
    %v47 = vxor.u32 %v45, 2147483648
    %v48 = vmul.f32 %v46, 1.442695
    %v49 = vpow.pop %v48
    %v50 = vmul.f32 %v47, 1.442695
    %v51 = vpow.pop %v50
    %v52 = vadd.f32 %v49, 1.0
    %v53 = vadd.f32 %v51, 1.0
    %v54 = vrcp.pop %v52
    %v55 = vmul.f32 %v52, %v54
    %v56 = vsub.f32 1.0, %v55
    %v57 = vmul.f32 %v54, %v56
    %v58 = vadd.f32 %v54, %v57
    %vm59 = vweird.f32 %v52
    %vm60 = vweird.f32 %v54
    %vm61 = vmor %vm59, %vm60
    %v62 = vsel %vm61, %v54, %v58
    %v63 = vand.u32 2147483647, %v52
    %vm64 = vcmp.eq.f32.partialorder %v63, 8.507059e+37
    %v65 = vand.u32 %v52, 2147483648
    %v66 = vor.u32 1.1754944e-38, %v65
    %v67 = vsel %vm64, %v66, %v62
    %v68 = vmul.f32 1.0, %v67
    %v69 = vrcp.pop %v53
    %v70 = vmul.f32 %v53, %v69
    %v71 = vsub.f32 1.0, %v70
    %v72 = vmul.f32 %v69, %v71
    %v73 = vadd.f32 %v69, %v72
    %vm74 = vweird.f32 %v53
    %vm75 = vweird.f32 %v69
    %vm76 = vmor %vm74, %vm75
    %v77 = vsel %vm76, %v69, %v73
    %v78 = vand.u32 2147483647, %v53
    %vm79 = vcmp.eq.f32.partialorder %v78, 8.507059e+37
    %v80 = vand.u32 %v53, 2147483648
    %v81 = vor.u32 1.1754944e-38, %v80
    %v82 = vsel %vm79, %v81, %v77
    %v83 = vmul.f32 1.0, %v82
    %v84 = vadd.f32 %v68, 1e-05
    %v85 = vadd.f32 %v83, 1e-05
    %v86 = vmul.f32 %v84, 1.0986123
    %v87 = vmul.f32 %v85, 1.0986123
    %v88 = vmul.f32 %v86, 1.442695
    %v89 = vpow.pop %v88
    %v90 = vmul.f32 %v87, 1.442695
    %v91 = vpow.pop %v90
    %v92 = vsub.f32 %v89, 1.0
    %v93 = vsub.f32 %v91, 1.0
    %v94 = vmul.f32 %v92, 2.0
    %v95 = vmul.f32 %v93, 2.0
    %v96 = vmul.f32 %v94, %v92
    %v97 = vmul.f32 %v95, %v93
    %v98 = vrcp.pop %v96
    %v99 = vmul.f32 %v96, %v98
    %v100 = vsub.f32 1.0, %v99
    %v101 = vmul.f32 %v98, %v100
    %v102 = vadd.f32 %v98, %v101
    %vm103 = vweird.f32 %v96
    %vm104 = vweird.f32 %v98
    %vm105 = vmor %vm103, %vm104
    %v106 = vsel %vm105, %v98, %v102
    %v107 = vand.u32 2147483647, %v96
    %vm108 = vcmp.eq.f32.partialorder %v107, 8.507059e+37
    %v109 = vand.u32 %v96, 2147483648
    %v110 = vor.u32 1.1754944e-38, %v109
    %v111 = vsel %vm108, %v110, %v106
    %v112 = vrcp.pop %v97
    %v113 = vmul.f32 %v97, %v112
    %v114 = vsub.f32 1.0, %v113
    %v115 = vmul.f32 %v112, %v114
    %v116 = vadd.f32 %v112, %v115
    %vm117 = vweird.f32 %v97
    %vm118 = vweird.f32 %v112
    %vm119 = vmor %vm117, %vm118
    %v120 = vsel %vm119, %v112, %v116
    %v121 = vand.u32 2147483647, %v97
    %vm122 = vcmp.eq.f32.partialorder %v121, 8.507059e+37
    %v123 = vand.u32 %v97, 2147483648
    %v124 = vor.u32 1.1754944e-38, %v123
    %v125 = vsel %vm122, %v124, %v120
    %v126 = vmul.f32 %v92, 2.5066283
    %v127 = vmul.f32 %v93, 2.5066283
    %v128 = vrcp.pop %v126
    %v129 = vmul.f32 %v126, %v128
    %v130 = vsub.f32 1.0, %v129
    %v131 = vmul.f32 %v128, %v130
    %v132 = vadd.f32 %v128, %v131
    %vm133 = vweird.f32 %v126
    %vm134 = vweird.f32 %v128
    %vm135 = vmor %vm133, %vm134
    %v136 = vsel %vm135, %v128, %v132
    %v137 = vand.u32 2147483647, %v126
    %vm138 = vcmp.eq.f32.partialorder %v137, 8.507059e+37
    %v139 = vand.u32 %v126, 2147483648
    %v140 = vor.u32 1.1754944e-38, %v139
    %v141 = vsel %vm138, %v140, %v136
    %v142 = vrcp.pop %v127
    %v143 = vmul.f32 %v127, %v142
    %v144 = vsub.f32 1.0, %v143
    %v145 = vmul.f32 %v142, %v144
    %v146 = vadd.f32 %v142, %v145
    %vm147 = vweird.f32 %v127
    %vm148 = vweird.f32 %v142
    %vm149 = vmor %vm147, %vm148
    %v150 = vsel %vm149, %v142, %v146
    %v151 = vand.u32 2147483647, %v127
    %vm152 = vcmp.eq.f32.partialorder %v151, 8.507059e+37
    %v153 = vand.u32 %v127, 2147483648
    %v154 = vor.u32 1.1754944e-38, %v153
    %v155 = vsel %vm152, %v154, %v150
    %v156 = vmul.f32 %v40, %v40
    %v157 = vmul.f32 %v41, %v41
    %v158 = vsub.f32 0.0, %v156
    %v159 = vsub.f32 0.0, %v157
    %161 = vset.pattern.permute.xlu0 0
    %162 = vperm.xlu0 %161, %v111
    %v163 = vpop.permute.xlu0 %162
    %166 = vset.pattern.permute.xlu0 0
    %167 = vperm.xlu0 %166, %v125
    %v168 = vpop.permute.xlu0 %167
    %v170 = vmul.f32 %v158, %v163
    %v171 = vmul.f32 %v159, %v168
    %v172 = vmul.f32 %v170, 1.442695
    %v173 = vpow.pop %v172
    %v174 = vmul.f32 %v171, 1.442695
    %v175 = vpow.pop %v174
    %177 = vset.pattern.permute.xlu0 0
    %178 = vperm.xlu0 %177, %v141
    %v179 = vpop.permute.xlu0 %178
    %182 = vset.pattern.permute.xlu0 0
    %183 = vperm.xlu0 %182, %v155
    %v184 = vpop.permute.xlu0 %183
    %v186 = vmul.f32 %v173, %v179
    %v187 = vmul.f32 %v175, %v184
    %v188 = vlaneseq
    %v189 = vshrl.u32 %v188, 7
    %v190 = vadd.s32 %v189, 8
    %v191 = vlaneseq
    %v192 = vand.u32 %v191, 127
    %vm193 = vcmp.eq.f32.partialorder %v40, 0.0
    %vm194 = vcmp.eq.f32.partialorder %v41, 0.0
    %vm195 = vcmp.ne.s32.totalorder %v189, %v192
    %vm196 = vcmp.ne.s32.totalorder %v190, %v192
    %vm197 = vmand %vm193, %vm195
    %vm198 = vmand %vm194, %vm196
    %v199 = vsel %vm197, 0.0, %v186
    %v200 = vsel %vm198, 0.0, %v187
    %vm201 = vcmask 130048
    %v202 = vsel %vm201, %v199, 0.0
    %v203 = vsel %vm201, %v200, 0.0
    %v204 = vadd.f32 %v202, %v203
    %v205 = vrot.slane %v204, 4
    %v206 = vadd.f32 %v204, %v205
    %v207 = vrot.slane %v206, 2
    %v208 = vadd.f32 %v206, %v207
    %v209 = vrot.slane %v208, 1
    %v210 = vadd.f32 %v208, %v209
    %v211 = vrcp.pop %v210
    %v212 = vmul.f32 %v210, %v211
    %v213 = vsub.f32 1.0, %v212
    %v214 = vmul.f32 %v211, %v213
    %v215 = vadd.f32 %v211, %v214
    %vm216 = vweird.f32 %v210
    %vm217 = vweird.f32 %v211
    %vm218 = vmor %vm216, %vm217
    %v219 = vsel %vm218, %v211, %v215
    %v220 = vand.u32 2147483647, %v210
    %vm221 = vcmp.eq.f32.partialorder %v220, 8.507059e+37
    %v222 = vand.u32 %v210, 2147483648
    %v223 = vor.u32 1.1754944e-38, %v222
    %v224 = vsel %vm221, %v223, %v219
    %v225 = vmul.f32 %v199, %v224
    %v226 = vmul.f32 %v200, %v224
    %227 = vst.msk [vmem:[#allocation6] sm:$0xff] %vm201, %v225
    %228 = vst.msk [vmem:[#allocation6 + $0x8] sm:$0xff] %vm201, %v226
    %v229 = vld [vmem:[%s2] sm:$0xff]
    %v230 = vld [vmem:[%s2 + $0x8] sm:$0xff]
    %v232 = vsel %vm201, %v225, 0
    %v235 = vsel %vm201, %v226, 0
    %237 = vmatpush.msra.mxu0 0.0
    %238 = vmatpush.msra.mxu0 0.0
    %239 = vmatpush.msra.mxu0 0.0
    %240 = vmatpush.msra.mxu0 0.0
    %241 = vmatpush.msra.mxu0 0.0
    %242 = vmatpush.msra.mxu0 0.0
    %243 = vmatpush.msra.mxu0 0.0
    %244 = vmatpush.msra.mxu0 0.0
    %245 = vmatpush.msra.mxu0 0.0
    %246 = vmatpush.msra.mxu0 0.0
    %247 = vmatpush.msra.mxu0 0.0
    %248 = vmatpush.msra.mxu0 0.0
    %249 = vmatpush.msra.mxu0 0.0
    %250 = vmatpush.msra.mxu0 0.0
    %251 = vmatpush.msra.mxu0 %v230
    %252 = vmatpush.msra.mxu0 %v229
    %253 = vmatmul.f32.gmra.mxu0 %v232
    %v254 = vpop.f32.mrf.mxu0
    %v255 = vadd.f32 0.0, %v254
    %256 = vmatmul.f32.gmra.mxu0 %v235
    %v257 = vpop.f32.mrf.mxu0
    %v258 = vadd.f32 0.0, %v257
    %259 = vdwg.mxu0
    %v260 = vld [vmem:[%s3] sm:$0xff]
    %vm261 = vcmask 64512
    %v263 = vsel %vm261, %v255, 0
    %v266 = vsel %vm261, %v258, 0
    %268 = vmatpush.msra.mxu0 0.0
    %269 = vmatpush.msra.mxu0 0.0
    %270 = vmatpush.msra.mxu0 0.0
    %271 = vmatpush.msra.mxu0 0.0
    %272 = vmatpush.msra.mxu0 0.0
    %273 = vmatpush.msra.mxu0 0.0
    %274 = vmatpush.msra.mxu0 0.0
    %275 = vmatpush.msra.mxu0 0.0
    %276 = vmatpush.msra.mxu0 0.0
    %277 = vmatpush.msra.mxu0 0.0
    %278 = vmatpush.msra.mxu0 0.0
    %279 = vmatpush.msra.mxu0 0.0
    %280 = vmatpush.msra.mxu0 0.0
    %281 = vmatpush.msra.mxu0 0.0
    %282 = vmatpush.msra.mxu0 0.0
    %283 = vmatpush.msra.mxu0 %v260
    %284 = vmatmul.f32.gmra.mxu0 %v263
    %v285 = vpop.f32.mrf.mxu0
    %v286 = vadd.f32 0.0, %v285
    %287 = vmatmul.f32.gmra.mxu0 %v266
    %v288 = vpop.f32.mrf.mxu0
    %v289 = vadd.f32 0.0, %v288
    %290 = vdwg.mxu0
    %v291 = vmax.f32 %v286, 0.0
    %v292 = vmax.f32 %v289, 0.0
    %293 = vmatpush.msra.mxu0 0.0
    %294 = vmatpush.msra.mxu0 0.0
    %295 = vmatpush.msra.mxu0 0.0
    %296 = vmatpush.msra.mxu0 0.0
    %297 = vmatpush.msra.mxu0 0.0
    %298 = vmatpush.msra.mxu0 0.0
    %299 = vmatpush.msra.mxu0 0.0
    %300 = vmatpush.msra.mxu0 0.0
    %301 = vmatpush.msra.mxu0 0.0
    %302 = vmatpush.msra.mxu0 0.0
    %303 = vmatpush.msra.mxu0 0.0
    %304 = vmatpush.msra.mxu0 0.0
    %305 = vmatpush.msra.mxu0 0.0
    %306 = vmatpush.msra.mxu0 0.0
    %307 = vmatpush.msra.mxu0 %v292
    %308 = vmatpush.msra.mxu0 %v291
    %309 = vmatmul.f32.gmra.mxu0 %v232
    %v310 = vpop.f32.mrf.mxu0
    %v311 = vadd.f32 0.0, %v310
    %312 = vmatmul.f32.gmra.mxu0 %v235
    %v313 = vpop.f32.mrf.mxu0
    %v314 = vadd.f32 0.0, %v313
    %315 = vdwg.mxu0
    %v316 = vld [vmem:[#allocation2] sm:$0xff]
    %v317 = vld [vmem:[#allocation2 + $0x8] sm:$0xff]
    %v318 = vld [vmem:[#allocation2 + $0x10] sm:$0xff]
    %v319 = vld [vmem:[#allocation2 + $0x18] sm:$0xff]
    %v320 = vld [vmem:[#allocation2 + $0x20] sm:$0xff]
    %v321 = vld [vmem:[#allocation2 + $0x28] sm:$0xff]
    %v322 = vld [vmem:[#allocation2 + $0x30] sm:$0xff]
    %v323 = vld [vmem:[#allocation2 + $0x38] sm:$0xff]
    %v324 = vld [vmem:[#allocation2 + $0x40] sm:$0xff]
    %v325 = vld [vmem:[#allocation2 + $0x48] sm:$0xff]
    %v326 = vld [vmem:[#allocation2 + $0x50] sm:$0xff]
    %v327 = vld [vmem:[#allocation2 + $0x58] sm:$0xff]
    %v328 = vld [vmem:[#allocation2 + $0x60] sm:$0xff]
    %v329 = vld [vmem:[#allocation2 + $0x68] sm:$0xff]
    %v330 = vld [vmem:[#allocation2 + $0x70] sm:$0xff]
    %v331 = vld [vmem:[#allocation2 + $0x78] sm:$0xff]
    %332 = vmatpush.msra.mxu0 %v331
    %333 = vmatpush.msra.mxu0 %v330
    %334 = vmatpush.msra.mxu0 %v329
    %335 = vmatpush.msra.mxu0 %v328
    %336 = vmatpush.msra.mxu0 %v327
    %337 = vmatpush.msra.mxu0 %v326
    %338 = vmatpush.msra.mxu0 %v325
    %339 = vmatpush.msra.mxu0 %v324
    %340 = vmatpush.msra.mxu0 %v323
    %341 = vmatpush.msra.mxu0 %v322
    %342 = vmatpush.msra.mxu0 %v321
    %343 = vmatpush.msra.mxu0 %v320
    %344 = vmatpush.msra.mxu0 %v319
    %345 = vmatpush.msra.mxu0 %v318
    %346 = vmatpush.msra.mxu0 %v317
    %347 = vmatpush.msra.mxu0 %v316
    %348 = vmatmul.f32.gmra.mxu0 %v311
    %v349 = vpop.f32.mrf.mxu0
    %v350 = vadd.f32 0.0, %v349
    %351 = vmatmul.f32.gmra.mxu0 %v314
    %v352 = vpop.f32.mrf.mxu0
    %v353 = vadd.f32 0.0, %v352
    %354 = vdwg.mxu0
    %v355 = vmax.f32 %v350, 0.0
    %v356 = vmax.f32 %v353, 0.0
    %357 = vst [vmem:[#allocation5] sm:$0xff] %v355
    %358 = vst [vmem:[#allocation5 + $0x8] sm:$0xff] %v356
    // Predicated region
    $region26: #{tpu_custom_call.1} parent=1 // pred_check
      _
    $region27: #{tpu_custom_call.1} parent=1 // pred_check_branch
      %360 = sbr.rel (0) target = $region29
    $region28: #{tpu_custom_call.1} parent=1 // pred_region
      %362 = vsyncadd [#allocation4], 0
      %s363 = sshll.u32 [#allocation5], 4
      %s364 = int_to_ptr.vmem [resolvable:$true] %s363
      %s365 = sshll.u32 %s5, 4
      %s366 = int_to_ptr.hbm [resolvable:$true] %s365
      %371 = dma.vmem_to_hbm [thread:$0]  %s364, 256, %s366, [#allocation4], 128, 128, 8
    $region29: #{tpu_custom_call.1} parent=1 // pred_fallthru
      _
    // Predicated region
    $region30: #{tpu_custom_call.1} parent=1 // pred_check
      _
    $region31: #{tpu_custom_call.1} parent=1 // pred_check_branch
      %373 = sbr.rel (0) target = $region33
    $region32: #{tpu_custom_call.1} parent=1 // pred_region
      %375 = vsyncadd [#allocation7], 0
      %s376 = sshll.u32 [#allocation6], 4
      %s377 = int_to_ptr.vmem [resolvable:$true] %s376
      %s378 = sshll.u32 %s6, 4
      %s379 = int_to_ptr.hbm [resolvable:$true] %s378
      %384 = dma.vmem_to_hbm [thread:$0]  %s377, 256, %s379, [#allocation7], 128, 128, 8
    $region33: #{tpu_custom_call.1} parent=1 // pred_fallthru
      _
    // Predicated region
    $region34: #{tpu_custom_call.1} parent=1 // pred_check
      _
    $region35: #{tpu_custom_call.1} parent=1 // pred_check_branch
      %386 = sbr.rel (0) target = $region37
    $region36: #{tpu_custom_call.1} parent=1 // pred_region
      %388 = dma.done [#allocation4], 256
    $region37: #{tpu_custom_call.1} parent=1 // pred_fallthru
      _
    // Predicated region
    $region38: #{tpu_custom_call.1} parent=1 // pred_check
      _
    $region39: #{tpu_custom_call.1} parent=1 // pred_check_branch
      %390 = sbr.rel (0) target = $region41
    $region40: #{tpu_custom_call.1} parent=1 // pred_region
      %392 = dma.done [#allocation7], 256
    $region41: #{tpu_custom_call.1} parent=1 // pred_fallthru
      _
    %393 = vsyncpa [#allocation3], 1
    %394 = vsyncpa [#allocation4], 1
    %395 = vsyncpa [#allocation7], 1

</llo_original>
